<compile_context>
chip_gen: v5e
topology: v5e:2x2
jax: 0.10.0
libtpu: 0.0.40
codegen_flags: <defaults>
</compile_context>

<pallas_src>
import numpy as np
import jax
import jax.numpy as jnp
from jax.experimental import pallas as pl
from jax.experimental.pallas import tpu as pltpu


def build_positional_encoding(d_model: int, max_len: int = 100) -> jnp.ndarray:
    """Deterministic buffer construction, matching nn.Module.__init__ (even d_model;
    odd d_model is handled by truncating the cos columns, where PyTorch would error)."""
    pe = np.zeros((max_len, d_model), dtype=np.float32)
    position = np.arange(0, max_len, dtype=np.float32)[:, None]              # (max_len, 1)
    div_term = np.exp(np.arange(0, d_model, 2, dtype=np.float32)
                      * (-np.log(10000.0) / d_model))                         # (ceil(D/2),)
    pe[:, 0::2] = np.sin(position * div_term)
    pe[:, 1::2] = np.cos(position * div_term)[:, : pe[:, 1::2].shape[1]]
    return jnp.asarray(pe)


def _pe_add_kernel(x_ref, pe_ref, o_ref):
    # x_ref / o_ref: (tb, tc) tile of the flattened (B, S*D) slab.
    # pe_ref:        (1, tc) tile of the flattened positional encoding, broadcast
    #                over the batch (sublane) axis -> a single vadd per vreg.
    o_ref[...] = x_ref[...] + pe_ref[...]


def _round_down(v: int, m: int) -> int:
    return (v // m) * m


def positional_encoding_forward(x: jnp.ndarray,
                                pe: jnp.ndarray,
                                start_idx: int = 0) -> jnp.ndarray:
    """x: [B, S, D]; pe: [max_len, D]; returns x + pe[start_idx:start_idx+S][None]."""
    B, S, D = x.shape
    max_len, d_model = pe.shape
    assert d_model == D, "pe feature dim must match x"
    if not isinstance(start_idx, (int, np.integer)):
        raise TypeError("start_idx must be a static Python int for this kernel path")
    start_idx = int(start_idx)
    if start_idx < 0 or start_idx + S > max_len:
        raise ValueError(
            f"start_idx + seq_len ({start_idx} + {S}) exceeds max_len ({max_len})")

    C = S * D
    itemsize = x.dtype.itemsize
    sub = max(8, 32 // itemsize)        # sublane alignment: 8 f32, 16 bf16, 32 int8
    lane = 128

    # Static slice + flatten: one (1, S*D) broadcast row, lane-dense layout.
    pe_row = pe[start_idx:start_idx + S, :].astype(x.dtype).reshape(1, C)
    x2 = x.reshape(B, C)                # contiguous reshape

    # ---------------- tile selection: batch axis first, then columns --------------
    VMEM_LIMIT = 48 << 20               # < v7x's 64 MiB physical; well under v5e/v6e
    BUDGET = 40 << 20                   # working budget, leaves Mosaic scratch headroom
    TILE_BYTES = 8 << 20                # aim ~8 MiB per x/out tile
    tile_elems = max(lane, TILE_BYTES // itemsize)

    # 1) batch (sublane) axis: full B when reasonable, else a large aligned chunk.
    tb = B if B <= 1024 else _round_down(1024, sub)

    # 2) column (lane) axis: fill the remaining tile budget, bounded so that
    #    4*tb*tc (x+out double buffers) + 2*sub*tc (padded pe double buffer) <= BUDGET.
    tc_budget = max(lane, BUDGET // (itemsize * (4 * tb + 2 * sub)))
    tc_want = min(max(lane, tile_elems // max(tb, 1)), tc_budget)
    tc = C if C <= tc_want else max(lane, _round_down(tc_want, lane))

    # 3) if C was small, spend the leftover budget on more batch rows instead
    #    (growing tb keeps the padded pe buffer small and increases pe reuse).
    tb_budget = max(1, (BUDGET // (itemsize * tc) - 2 * sub) // 4)
    tb_want = min(max(1, tile_elems // tc), tb_budget)
    if tb < tb_want:
        tb = B if B <= tb_want else max(sub, _round_down(min(tb_want, B), sub))

    nb = pl.cdiv(B, tb)
    nc = pl.cdiv(C, tc)

    # Expose >= 2 "parallel" grid steps only for non-trivial arrays (multi-TC parts
    # like v7x shard them; 1-TC parts pay one extra ~0.35 us step, negligible here).
    total_bytes = B * C * itemsize
    if nb * nc < 2 and total_bytes >= (2 << 20):
        if C >= 2 * lane:
            tc = max(lane, _round_down(pl.cdiv(C, 2), lane))
            nc = pl.cdiv(C, tc)
        elif B > sub:
            tb = max(sub, _round_down(pl.cdiv(B, 2), sub))
            nb = pl.cdiv(B, tb)

    cost = pl.CostEstimate(
        flops=B * C,                                    # one add per element
        bytes_accessed=(2 * B * C + C) * itemsize,      # read x + pe, write out
        transcendentals=0)

    out2 = pl.pallas_call(
        _pe_add_kernel,
        out_shape=jax.ShapeDtypeStruct((B, C), x.dtype),
        grid=(nc, nb),                                   # columns outermost: pe row is
        in_specs=[                                       # re-fetched only nc times
            pl.BlockSpec((tb, tc), lambda j, i: (i, j)),   # x slab
            pl.BlockSpec((1, tc), lambda j, i: (0, j)),    # pe broadcast row
        ],
        out_specs=pl.BlockSpec((tb, tc), lambda j, i: (i, j)),
        input_output_aliases={0: 0},                     # reuse x2's HBM buffer for out
        cost_estimate=cost,
        compiler_params=pltpu.CompilerParams(
            dimension_semantics=("parallel", "parallel"),
            vmem_limit_bytes=VMEM_LIMIT),
    )(x2, pe_row)

    return out2.reshape(B, S, D)


if __name__ == "__main__":
    B, S, D = 2, 8, 32
    max_len = 100
    start_idx = 3

    key = jax.random.PRNGKey(0)
    x = jax.random.normal(key, (B, S, D), dtype=jnp.float32)

    pe = build_positional_encoding(D, max_len)

    # Pure-JAX reference (computed before the kernel in case the slab gets aliased).
    ref = x + pe[start_idx:start_idx + S][None, :, :]

    y = positional_encoding_forward(x, pe, start_idx=start_idx)
    y = jax.block_until_ready(y)

    np.testing.assert_allclose(np.asarray(y), np.asarray(ref), rtol=1e-6, atol=1e-6)

    print("KERNEL_OK")
</pallas_src>

<mosaic_0001>
module attributes {stable_mosaic.version = 11 : i64} {
  func.func @_pe_add_kernel(%arg0: i32, %arg1: i32, %arg2: memref<2x256xf32, #tpu.memory_space<vmem>>, %arg3: memref<1x256xf32, #tpu.memory_space<vmem>>, %arg4: memref<2x256xf32, #tpu.memory_space<vmem>>) attributes {dimension_semantics = [#tpu.dimension_semantics<parallel>, #tpu.dimension_semantics<parallel>], iteration_bounds = array<i64: 1, 1>, scalar_prefetch = 0 : i64, scratch_operands = 0 : i64, tpu.core_type = #tpu.core_type<tc>, window_params = [{transform_indices = @transform_0, window_bounds = array<i64: 2, 256>}, {transform_indices = @transform_1, window_bounds = array<i64: 1, 256>}, {transform_indices = @transform_2, window_bounds = array<i64: 2, 256>}]} {
    %c0 = arith.constant 0 : index
    %c0_0 = arith.constant 0 : index
    %0 = vector.load %arg2[%c0, %c0_0] : memref<2x256xf32, #tpu.memory_space<vmem>>, vector<2x256xf32>
    %c0_1 = arith.constant 0 : index
    %c0_2 = arith.constant 0 : index
    %1 = vector.load %arg3[%c0_1, %c0_2] : memref<1x256xf32, #tpu.memory_space<vmem>>, vector<1x256xf32>
    %2 = vector.broadcast %1 : vector<1x256xf32> to vector<2x256xf32>
    %3 = arith.addf %0, %2 : vector<2x256xf32>
    %c0_3 = arith.constant 0 : index
    %c0_4 = arith.constant 0 : index
    %4 = vector.load %arg4[%c0_3, %c0_4] : memref<2x256xf32, #tpu.memory_space<vmem>>, vector<2x256xf32>
    tpu.vector_store %arg4[%c0_3, %c0_4], %3 {strides = array<i32>} : memref<2x256xf32, #tpu.memory_space<vmem>>, vector<2x256xf32>,
    return
  }
  func.func @transform_0(%arg0: i32, %arg1: i32) -> (i32, i32) {
    %c0_i32 = arith.constant 0 : i32
    return %arg1, %arg0 : i32, i32
  }
  func.func @transform_1(%arg0: i32, %arg1: i32) -> (i32, i32) {
    %c0_i32 = arith.constant 0 : i32
    %c0_i32_0 = arith.constant 0 : i32
    return %c0_i32, %arg0 : i32, i32
  }
  func.func @transform_2(%arg0: i32, %arg1: i32) -> (i32, i32) {
    %c0_i32 = arith.constant 0 : i32
    return %arg1, %arg0 : i32, i32
  }
}

</mosaic_0001>

<llo_original>
// kernel: tpu_custom_call.1
$region0: #{tpu_custom_call.1}
  #allocation0 [shape = 'u32[]', space=smem, size = 0x4, offset = 0x4, fixed_abs, tag = 'smem constant byte address 0x4 - core index']
  #allocation1 [shape = 'u32[72,128]{1,0:T(1,128)}', space=vmem, size = 0x9000, scoped, tag = 'internal scratch']
  %s0 = inlined_call_operand.hbm [shape: f32[2,256], index: 0, kind: input, shape index: {}, may-alias: {0,2}]
  %s1 = inlined_call_operand.vmem [shape: f32[1,256], index: 1, kind: input, shape index: {}]
  %s2 = inlined_call_operand.hbm [shape: f32[2,256], index: 2, kind: output, shape index: {}, may-alias: {0,2}]
  %s3 = sld [smem:[#allocation0]]
  $region22: #{tpu_custom_call.1} parent=0
    _
  %s5 = ssub.s32 1, %s3
  %s6 = scalar_select 0, %s5, %s3
  $region1: #{tpu_custom_call.1} parent=0
    #allocation2 [shape = 'u8[2048]{0}', space=vmem, size = 0x800, scoped, tag = 'input window, operand 0, single buffered']
    #allocation3 [shape = 's32[1]{0}', space=sflag, size = 0x4, scoped, tag = 'scoped memory for tpu_custom_call.1']
    #allocation4 [shape = 's32[1]{0}', space=sflag, size = 0x4, scoped, tag = 'scoped memory for tpu_custom_call.1']
    #allocation5 [shape = 'u8[2048]{0}', space=vmem, size = 0x800, scoped, tag = 'output window, operand 0, single buffered']
    %7 = vsyncpa [#allocation3], 0
    %8 = vsyncpa [#allocation4], 0
    // Predicated region
    $region2: #{tpu_custom_call.1} parent=1 // pred_check
      _
    $region3: #{tpu_custom_call.1} parent=1 // pred_check_branch
      %10 = sbr.rel (0) target = $region5
    $region4: #{tpu_custom_call.1} parent=1 // pred_region
      %12 = vsyncadd [#allocation3], 0
      %s14 = sshll.u32 %s0, 4
      %s15 = int_to_ptr.hbm [resolvable:$true] %s14
      %s16 = sshll.u32 [#allocation2], 4
      %s17 = int_to_ptr.vmem [resolvable:$true] %s16
      %19 = dma.hbm_to_vmem [thread:$0]  %s15, 64, %s17, [#allocation3]
    $region5: #{tpu_custom_call.1} parent=1 // pred_fallthru
      _
    // Predicated region
    $region6: #{tpu_custom_call.1} parent=1 // pred_check
      _
    $region7: #{tpu_custom_call.1} parent=1 // pred_check_branch
      %21 = sbr.rel (0) target = $region9
    $region8: #{tpu_custom_call.1} parent=1 // pred_region
      _
    $region9: #{tpu_custom_call.1} parent=1 // pred_fallthru
      _
    // Predicated region
    $region10: #{tpu_custom_call.1} parent=1 // pred_check
      _
    $region11: #{tpu_custom_call.1} parent=1 // pred_check_branch
      %23 = sbr.rel (0) target = $region13
    $region12: #{tpu_custom_call.1} parent=1 // pred_region
      %25 = dma.done [#allocation3], 64
    $region13: #{tpu_custom_call.1} parent=1 // pred_fallthru
      _
    %v26 = vld [vmem:[#allocation2] sm:$0xf]
    %v27 = vld [vmem:[%s1] sm:$0x3]
    %v29 = vperm.slane %v27, 0
    %v30 = vperm.slane %v27, 1
    %v31 = vrot.slane %v30, 6
    %vm32 = vcmask 1041408
    %v33 = vsel %vm32, %v29, %v31
    %v35 = vadd.f32 %v26, %v33
    %36 = vst [vmem:[#allocation5] sm:$0xf] %v35
    // Predicated region
    $region14: #{tpu_custom_call.1} parent=1 // pred_check
      _
    $region15: #{tpu_custom_call.1} parent=1 // pred_check_branch
      %38 = sbr.rel (0) target = $region17
    $region16: #{tpu_custom_call.1} parent=1 // pred_region
      %40 = vsyncadd [#allocation4], 0
      %s42 = sshll.u32 [#allocation5], 4
      %s43 = int_to_ptr.vmem [resolvable:$true] %s42
      %s44 = sshll.u32 %s2, 4
      %s45 = int_to_ptr.hbm [resolvable:$true] %s44
      %47 = dma.vmem_to_hbm [thread:$0]  %s43, 64, %s45, [#allocation4]
    $region17: #{tpu_custom_call.1} parent=1 // pred_fallthru
      _
    // Predicated region
    $region18: #{tpu_custom_call.1} parent=1 // pred_check
      _
    $region19: #{tpu_custom_call.1} parent=1 // pred_check_branch
      %49 = sbr.rel (0) target = $region21
    $region20: #{tpu_custom_call.1} parent=1 // pred_region
      %51 = dma.done [#allocation4], 64
    $region21: #{tpu_custom_call.1} parent=1 // pred_fallthru
      _
    %52 = vsyncpa [#allocation3], 1
    %53 = vsyncpa [#allocation4], 1

</llo_original>
